<compile_context>
chip_gen: v5e
topology: v5e:2x2
jax: 0.10.0
libtpu: 0.0.40
codegen_flags: <defaults>
</compile_context>

<pallas_src>
import jax
import jax.numpy as jnp
from jax.experimental import pallas as pl
from jax.experimental.pallas import tpu as pltpu


# Tile sizes: TS x TV x 4 B = 4 MiB per output buffer (8 MiB double-buffered),
# safe under the scoped VMEM default on v5e (16 MiB), v6e (32 MiB), v7x (32 MiB),
# and >=512-wide tiles already sit near the HBM write roofline.
_TS_MAX = 512    # sequence-position tile (sublane axis), multiple of 8
_TV_MAX = 2048   # vocab tile (lane axis), multiple of 128


def _round_up(x: int, m: int) -> int:
    return ((x + m - 1) // m) * m


def _onehot_kernel(ids_ref, o_ref):
    # ids_ref: [TS, 1]  int32 token ids (-1 == padding -> matches no column)
    # o_ref  : [TS, TV] one-hot output tile; global column offset = j * TV
    TS, TV = o_ref.shape
    j = pl.program_id(1)
    ids = ids_ref[...]                                            # (TS, 1)
    col = jax.lax.broadcasted_iota(jnp.int32, (TS, TV), 1) + j * TV
    o_ref[...] = (col == ids).astype(o_ref.dtype)                 # broadcast compare + cast


def one_hot_encode(token_ids: jax.Array, vocab_size: int,
                   dtype=jnp.float32) -> jax.Array:
    """token_ids: int32 [S], padding encoded as -1. Returns `dtype` [S, V].

    Invariant: -1 is a safe padding sentinel because no vocab column index is
    ever negative. `dtype` defaults to float32 to match torch.zeros; pass
    jnp.bfloat16 to halve HBM write traffic (0/1 are exact in bf16).
    """
    S = int(token_ids.shape[0])
    V = int(vocab_size)

    # Lane-dense tiling: pad V to a multiple of 128 (full unmasked stores) and
    # S to a multiple of 8; then round both up to a whole number of tiles.
    V_pad = _round_up(V, 128)
    TV = min(_TV_MAX, V_pad)
    V_pad = _round_up(V_pad, TV)

    S_pad = _round_up(max(S, 8), 8)
    TS = min(_TS_MAX, S_pad)
    S_pad = _round_up(S_pad, TS)

    ids = token_ids.astype(jnp.int32)
    if S_pad != S:
        # -1 padding rows are semantically free: they produce all-zero rows.
        ids = jnp.pad(ids, (0, S_pad - S), constant_values=-1)
    ids2d = ids.reshape(S_pad, 1)

    grid = (S_pad // TS, V_pad // TV)
    out = pl.pallas_call(
        _onehot_kernel,
        out_shape=jax.ShapeDtypeStruct((S_pad, V_pad), dtype),
        grid=grid,
        in_specs=[pl.BlockSpec((TS, 1), lambda i, j: (i, 0))],
        out_specs=pl.BlockSpec((TS, TV), lambda i, j: (i, j)),
        compiler_params=pltpu.CompilerParams(
            # Both grid axes are independent writes -> shard across the two
            # v7x TensorCores; harmless no-op on single-TC v5e/v6e.
            dimension_semantics=("parallel", "parallel")),
    )(ids2d)

    # Slice off the tiling padding.
    return out[:S, :V]


class OneHotEncodeTransform:
    """JAX/Pallas port of the PyTorch OneHotEncodeTransform."""

    def __init__(self, vocabulary, padding_token: str = "<pad>"):
        self._vocabulary = list(vocabulary)
        self._padding_token = padding_token
        self._index = {tok: i for i, tok in enumerate(self._vocabulary)}

    def __call__(self, sequence):
        # Glue: string -> id mapping (no Pallas equivalent for string ops).
        ids = [
            -1 if tok == self._padding_token else self._index[tok]
            for tok in sequence
        ]
        ids = jnp.asarray(ids, dtype=jnp.int32)
        return one_hot_encode(ids, len(self._vocabulary))


if __name__ == "__main__":
    # --- Example 1: string-transform path matching the PyTorch module. ---
    vocab_size = 32
    seq_len = 8
    vocabulary = [f"tok{i}" for i in range(vocab_size)]
    pad = "<pad>"

    key = jax.random.PRNGKey(0)
    idx = jax.random.randint(key, (seq_len,), 0, vocab_size)
    sequence = [vocabulary[int(i)] for i in idx]
    # Make a couple of positions padding tokens.
    sequence[2] = pad
    sequence[5] = pad

    transform = OneHotEncodeTransform(vocabulary, padding_token=pad)
    out = jax.block_until_ready(transform(sequence))

    # Reference check (plain JAX), mirrors the PyTorch loop.
    ref = jnp.zeros((seq_len, vocab_size), jnp.float32)
    for i, tok in enumerate(sequence):
        if tok != pad:
            ref = ref.at[i, vocabulary.index(tok)].set(1.0)

    assert out.shape == (seq_len, vocab_size)
    assert out.dtype == jnp.float32
    assert bool(jnp.all(out == ref))

    # --- Example 2: multi-tile grid sanity check (integer-id hot path). ---
    S2, V2 = 1050, 3000   # grid = (3, 2) after padding to (1536, 4096)
    ids2 = jax.random.randint(jax.random.PRNGKey(0), (S2,), -1, V2)  # -1 == pad
    out2 = jax.block_until_ready(one_hot_encode(ids2.astype(jnp.int32), V2))
    ref2 = (ids2[:, None] == jnp.arange(V2, dtype=jnp.int32)[None, :]
            ).astype(jnp.float32)
    assert out2.shape == (S2, V2)
    assert out2.dtype == jnp.float32
    assert bool(jnp.all(out2 == ref2))

    print("KERNEL_OK")
</pallas_src>

<mosaic_0001>
module attributes {stable_mosaic.version = 11 : i64} {
  func.func @_onehot_kernel(%arg0: i32, %arg1: i32, %arg2: memref<8x1xi32, #tpu.memory_space<vmem>>, %arg3: memref<8x128xf32, #tpu.memory_space<vmem>>) attributes {dimension_semantics = [#tpu.dimension_semantics<parallel>, #tpu.dimension_semantics<parallel>], iteration_bounds = array<i64: 1, 1>, scalar_prefetch = 0 : i64, scratch_operands = 0 : i64, tpu.core_type = #tpu.core_type<tc>, window_params = [{transform_indices = @transform_0, window_bounds = array<i64: 8, 1>}, {transform_indices = @transform_1, window_bounds = array<i64: 8, 128>}]} {
    %c0 = arith.constant 0 : index
    %c0_0 = arith.constant 0 : index
    %0 = vector.load %arg2[%c0, %c0_0] : memref<8x1xi32, #tpu.memory_space<vmem>>, vector<8x1xi32>
    %1 = tpu.iota {dimensions = array<i32: 1>} : vector<8x128xi32>
    %c128_i32 = arith.constant 128 : i32
    %2 = arith.muli %arg1, %c128_i32 : i32
    %3 = vector.broadcast %2 : i32 to vector<8x128xi32>
    %4 = arith.addi %1, %3 : vector<8x128xi32>
    %5 = vector.broadcast %0 : vector<8x1xi32> to vector<8x128xi32>
    %6 = arith.cmpi eq, %4, %5 : vector<8x128xi32>
    %7 = arith.extui %6 : vector<8x128xi1> to vector<8x128xi32>
    %8 = arith.sitofp %7 : vector<8x128xi32> to vector<8x128xf32>
    %c0_1 = arith.constant 0 : index
    %c0_2 = arith.constant 0 : index
    %9 = vector.load %arg3[%c0_1, %c0_2] : memref<8x128xf32, #tpu.memory_space<vmem>>, vector<8x128xf32>
    tpu.vector_store %arg3[%c0_1, %c0_2], %8 {strides = array<i32>} : memref<8x128xf32, #tpu.memory_space<vmem>>, vector<8x128xf32>,
    return
  }
  func.func @transform_0(%arg0: i32, %arg1: i32) -> (i32, i32) {
    %c0_i32 = arith.constant 0 : i32
    %c0_i32_0 = arith.constant 0 : i32
    return %arg0, %c0_i32 : i32, i32
  }
  func.func @transform_1(%arg0: i32, %arg1: i32) -> (i32, i32) {
    %c0_i32 = arith.constant 0 : i32
    return %arg0, %arg1 : i32, i32
  }
}

</mosaic_0001>

<llo_original>
// kernel: tpu_custom_call.1
$region0: #{tpu_custom_call.1}
  #allocation0 [shape = 'u32[]', space=smem, size = 0x4, offset = 0x4, fixed_abs, tag = 'smem constant byte address 0x4 - core index']
  #allocation1 [shape = 'u32[72,128]{1,0:T(1,128)}', space=vmem, size = 0x9000, scoped, tag = 'internal scratch']
  %s0 = inlined_call_operand.vmem [shape: s32[8,1], index: 0, kind: input, shape index: {}]
  %s1 = inlined_call_operand.hbm [shape: f32[8,128], index: 1, kind: output, shape index: {}]
  %s2 = sld [smem:[#allocation0]]
  $region14: #{tpu_custom_call.1} parent=0
    _
  %s4 = ssub.s32 1, %s2
  %s5 = scalar_select 0, %s4, %s2
  $region1: #{tpu_custom_call.1} parent=0
    #allocation2 [shape = 'u8[4096]{0}', space=vmem, size = 0x1000, scoped, tag = 'output window, operand 0, single buffered']
    #allocation3 [shape = 's32[1]{0}', space=sflag, size = 0x4, scoped, tag = 'scoped memory for tpu_custom_call.1']
    %6 = vsyncpa [#allocation3], 0
    // Predicated region
    $region2: #{tpu_custom_call.1} parent=1 // pred_check
      _
    $region3: #{tpu_custom_call.1} parent=1 // pred_check_branch
      %8 = sbr.rel (0) target = $region5
    $region4: #{tpu_custom_call.1} parent=1 // pred_region
      _
    $region5: #{tpu_custom_call.1} parent=1 // pred_fallthru
      _
    %v9 = vld [vmem:[%s0] sm:$0xff]
    %v10 = vlaneseq
    %v11 = vand.u32 %v10, 127
    %s12 = smul.u32 0, 128
    %v13 = vstv %s12
    %v14 = vadd.s32 %v11, %v13
    %15 = vset.pattern.permute.xlu0 0
    %16 = vperm.xlu0 %15, %v9
    %v17 = vpop.permute.xlu0 %16
    %vm18 = vcmp.eq.s32.totalorder %v14, %v17
    %v19 = vsel %vm18, 1, 0
    %v20 = vcvt.s32.f32 %v19
    %21 = vst [vmem:[#allocation2] sm:$0xff] %v20
    // Predicated region
    $region6: #{tpu_custom_call.1} parent=1 // pred_check
      _
    $region7: #{tpu_custom_call.1} parent=1 // pred_check_branch
      %23 = sbr.rel (0) target = $region9
    $region8: #{tpu_custom_call.1} parent=1 // pred_region
      %25 = vsyncadd [#allocation3], 0
      %s27 = sshll.u32 [#allocation2], 4
      %s28 = int_to_ptr.vmem [resolvable:$true] %s27
      %s29 = sshll.u32 %s1, 4
      %s30 = int_to_ptr.hbm [resolvable:$true] %s29
      %32 = dma.vmem_to_hbm [thread:$0]  %s28, 128, %s30, [#allocation3]
    $region9: #{tpu_custom_call.1} parent=1 // pred_fallthru
      _
    // Predicated region
    $region10: #{tpu_custom_call.1} parent=1 // pred_check
      _
    $region11: #{tpu_custom_call.1} parent=1 // pred_check_branch
      %34 = sbr.rel (0) target = $region13
    $region12: #{tpu_custom_call.1} parent=1 // pred_region
      %36 = dma.done [#allocation3], 128
    $region13: #{tpu_custom_call.1} parent=1 // pred_fallthru
      _
    %37 = vsyncpa [#allocation3], 1

</llo_original>
